<compile_context>
chip_gen: v5e
topology: v5e:2x2
jax: 0.10.0
libtpu: 0.0.40
codegen_flags: <defaults>
</compile_context>

<pallas_src>
import functools

import jax
import jax.numpy as jnp
from jax import lax
from jax.experimental import pallas as pl
from jax.experimental.pallas import tpu as pltpu


def _round_up(n, m):
    return ((n + m - 1) // m) * m


def _resnet1d_fused_kernel(x_ref, w1_ref, b1_ref, w2_ref, b2_ref, o_ref,
                           hpad_ref, *, dilations, pad_off, seq_len):
    """All residual blocks fused, one batch element per grid step.

    x_ref:    (1, L, Cp)     input activation, channels-last (channel -> lanes)
    w1_ref:   (D, 3*Cp, Cp)  dilated conv3 weights, rows ordered [tap -d | 0 | +d]
    b1_ref:   (D, 1, Cp)
    w2_ref:   (D, Cp, Cp)    1x1 conv weights
    b2_ref:   (D, 1, Cp)
    o_ref:    (1, L, Cp)
    hpad_ref: (rows, Cp)     VMEM scratch with a zero halo for the conv taps
    """
    L = seq_len
    # Residual accumulator stays in f32 for the whole depth loop.
    x = x_ref[0].astype(jnp.float32)

    # Zero once: the halo rows are never written afterwards, so any tap that
    # reaches outside [0, L) reads exact zeros (== Conv1d zero padding).
    hpad_ref[...] = jnp.zeros_like(hpad_ref)

    for d_idx, d in enumerate(dilations):          # unrolled, dilation static
        # activation1 (norm=None -> Identity); cast to matmul operand dtype.
        h = jnp.maximum(x, 0.0).astype(hpad_ref.dtype)
        hpad_ref[pl.ds(pad_off, L), :] = h         # 8-aligned interior store

        # Three taps (l-d, l, l+d) as static slices of the padded buffer,
        # fused into ONE (L, 3Cp) @ (3Cp, Cp) MXU matmul.
        taps = [hpad_ref[pl.ds(pad_off + (k - 1) * d, L), :] for k in range(3)]
        hcat = jnp.concatenate(taps, axis=-1)      # (L, 3*Cp)
        y = jnp.dot(hcat, w1_ref[d_idx], preferred_element_type=jnp.float32)
        y = y + b1_ref[d_idx].astype(jnp.float32)

        # activation2 + 1x1 conv (plain channel matmul) + residual.
        y = jnp.maximum(y, 0.0).astype(w2_ref.dtype)
        z = jnp.dot(y, w2_ref[d_idx], preferred_element_type=jnp.float32)
        z = z + b2_ref[d_idx].astype(jnp.float32)
        x = z + x

    o_ref[0] = x.astype(o_ref.dtype)


def resnet1d_forward(x_ncl, params):
    """Full Resnet1D forward. x_ncl: (B, C, L) as in PyTorch Conv1d.

    params: list of (w1 (3,C,C) [k,c_in,c_out], b1 (1,C), w2 (C,C) [c_in,c_out],
                     b2 (1,C), dilation)
    """
    B, C, L = x_ncl.shape
    D = len(params)
    dilations = tuple(int(p[4]) for p in params)
    max_d = max(dilations)

    # Pad channels to a full 128-lane vreg (lane-dense stores, full MXU width).
    Cp = _round_up(C, 128)
    dc = Cp - C
    pdt = params[0][0].dtype

    w1s, b1s, w2s, b2s = [], [], [], []
    for (w1, b1, w2, b2, _dil) in params:
        w1p = jnp.pad(w1, ((0, 0), (0, dc), (0, dc)))      # (3, Cp, Cp)
        w1s.append(w1p.reshape(3 * Cp, Cp))                # rows: k*Cp + c_in
        b1s.append(jnp.pad(b1, ((0, 0), (0, dc))))
        w2s.append(jnp.pad(w2, ((0, dc), (0, dc))))
        b2s.append(jnp.pad(b2, ((0, 0), (0, dc))))
    w1_all = jnp.stack(w1s)                                # (D, 3Cp, Cp)
    b1_all = jnp.stack(b1s)                                # (D, 1, Cp)
    w2_all = jnp.stack(w2s)                                # (D, Cp, Cp)
    b2_all = jnp.stack(b2s)                                # (D, 1, Cp)

    x = jnp.transpose(x_ncl, (0, 2, 1))                    # (B, L, C)
    if dc:
        x = jnp.pad(x, ((0, 0), (0, 0), (0, dc)))          # (B, L, Cp)

    pad_off = _round_up(max_d, 8)                          # 8-aligned interior
    rows = _round_up(pad_off + L + max_d, 8)

    kernel = functools.partial(_resnet1d_fused_kernel, dilations=dilations,
                               pad_off=pad_off, seq_len=L)

    # TODO(synk): for very long sequences, tile L with a +/- max_d halo per
    # block; at these sizes the whole (L, Cp) slab fits VMEM comfortably.
    out = pl.pallas_call(
        kernel,
        out_shape=jax.ShapeDtypeStruct((B, L, Cp), x_ncl.dtype),
        grid_spec=pltpu.PrefetchScalarGridSpec(
            num_scalar_prefetch=0,
            grid=(B,),
            in_specs=[
                pl.BlockSpec((1, L, Cp), lambda b: (b, 0, 0)),
                pl.BlockSpec((D, 3 * Cp, Cp), lambda b: (0, 0, 0)),
                pl.BlockSpec((D, 1, Cp), lambda b: (0, 0, 0)),
                pl.BlockSpec((D, Cp, Cp), lambda b: (0, 0, 0)),
                pl.BlockSpec((D, 1, Cp), lambda b: (0, 0, 0)),
            ],
            out_specs=pl.BlockSpec((1, L, Cp), lambda b: (b, 0, 0)),
            scratch_shapes=[pltpu.VMEM((rows, Cp), pdt)],
        ),
        compiler_params=pltpu.CompilerParams(
            dimension_semantics=("parallel",)),
    )(x, w1_all, b1_all, w2_all, b2_all)

    out = out[:, :, :C]
    return jnp.transpose(out, (0, 2, 1))                   # (B, C, L)


def init_resnet1d(key, n_in, n_depth, dilation_growth_rate=1,
                  reverse_dilation=True):
    """Deterministic params. Returns list of (w1, b1, w2, b2, dilation)
    where w1: (3, C, C) [k, c_in, c_out], w2: (C, C) [c_in, c_out]."""
    dilations = [dilation_growth_rate ** d for d in range(n_depth)]
    if reverse_dilation:
        dilations = dilations[::-1]
    params = []
    for dil in dilations:
        k1, k2, k3, k4, key = jax.random.split(key, 5)
        # PyTorch Conv1d weight layout: (out, in, kernel)
        w1_oik = 0.1 * jax.random.normal(k1, (n_in, n_in, 3), jnp.float32)
        b1 = 0.1 * jax.random.normal(k2, (1, n_in), jnp.float32)
        w2_oik = 0.1 * jax.random.normal(k3, (n_in, n_in, 1), jnp.float32)
        b2 = 0.1 * jax.random.normal(k4, (1, n_in), jnp.float32)
        w1 = jnp.transpose(w1_oik, (2, 1, 0))              # (3, c_in, c_out)
        w2 = jnp.transpose(w2_oik[:, :, 0])                # (c_in, c_out)
        params.append((w1, b1, w2, b2, dil))
    return params


# ---------------- pure-JAX reference (mirrors the PyTorch forward) ----------
def _ref_block(x_ncl, w1, b1, w2, b2, dilation):
    # reconstruct PyTorch-layout weights (out, in, k)
    w1_oik = jnp.transpose(w1, (2, 1, 0))
    w2_oik = jnp.transpose(w2)[:, :, None]
    h = jnp.maximum(x_ncl, 0.0)
    y = lax.conv_general_dilated(
        h, w1_oik, window_strides=(1,), padding=[(dilation, dilation)],
        rhs_dilation=(dilation,), dimension_numbers=("NCH", "OIH", "NCH"))
    y = y + b1[0][None, :, None]
    y = jnp.maximum(y, 0.0)
    z = lax.conv_general_dilated(
        y, w2_oik, window_strides=(1,), padding=[(0, 0)],
        dimension_numbers=("NCH", "OIH", "NCH"))
    z = z + b2[0][None, :, None]
    return z + x_ncl


def resnet1d_reference(x_ncl, params):
    x = x_ncl
    for (w1, b1, w2, b2, dilation) in params:
        x = _ref_block(x, w1, b1, w2, b2, dilation)
    return x


if __name__ == "__main__":
    key = jax.random.PRNGKey(0)
    B, C, L = 2, 32, 16          # batch, channels (n_in), sequence length
    n_depth = 2
    growth = 2                   # dilations [1, 2] -> reversed -> [2, 1]

    kx, kp = jax.random.split(key)
    x = jax.random.normal(kx, (B, C, L), jnp.float32)   # NCL, as PyTorch

    params = init_resnet1d(kp, C, n_depth, dilation_growth_rate=growth,
                           reverse_dilation=True)

    out = resnet1d_forward(x, params)
    out = jax.block_until_ready(out)

    ref = resnet1d_reference(x, params)
    assert out.shape == (B, C, L)
    assert jnp.allclose(out, ref, atol=1e-4, rtol=1e-4), \
        f"max err {jnp.max(jnp.abs(out - ref))}"

    print("KERNEL_OK")
</pallas_src>

<mosaic_0001>
module attributes {stable_mosaic.version = 11 : i64} {
  func.func @_resnet1d_fused_kernel(%arg0: i32, %arg1: memref<1x16x128xf32, #tpu.memory_space<vmem>>, %arg2: memref<2x384x128xf32, #tpu.memory_space<vmem>>, %arg3: memref<2x1x128xf32, #tpu.memory_space<vmem>>, %arg4: memref<2x128x128xf32, #tpu.memory_space<vmem>>, %arg5: memref<2x1x128xf32, #tpu.memory_space<vmem>>, %arg6: memref<1x16x128xf32, #tpu.memory_space<vmem>>, %arg7: memref<32x128xf32, #tpu.memory_space<vmem>>) attributes {dimension_semantics = [#tpu.dimension_semantics<parallel>], iteration_bounds = array<i64: 2>, scalar_prefetch = 0 : i64, scratch_operands = 1 : i64, tpu.core_type = #tpu.core_type<tc>, window_params = [{transform_indices = @transform_0, window_bounds = array<i64: 1, 16, 128>}, {pipeline_mode = #tpu.pipeline_mode<synchronous>, transform_indices = @transform_1, window_bounds = array<i64: 2, 384, 128>}, {pipeline_mode = #tpu.pipeline_mode<synchronous>, transform_indices = @transform_2, window_bounds = array<i64: 2, 1, 128>}, {pipeline_mode = #tpu.pipeline_mode<synchronous>, transform_indices = @transform_3, window_bounds = array<i64: 2, 128, 128>}, {pipeline_mode = #tpu.pipeline_mode<synchronous>, transform_indices = @transform_4, window_bounds = array<i64: 2, 1, 128>}, {transform_indices = @transform_5, window_bounds = array<i64: 1, 16, 128>}]} {
    %c0 = arith.constant 0 : index
    %c0_0 = arith.constant 0 : index
    %c0_1 = arith.constant 0 : index
    %0 = vector.load %arg1[%c0, %c0_0, %c0_1] : memref<1x16x128xf32, #tpu.memory_space<vmem>>, vector<1x16x128xf32>
    %1 = vector.shape_cast %0 : vector<1x16x128xf32> to vector<16x128xf32>
    %cst = arith.constant 0.000000e+00 : f32
    %2 = vector.broadcast %cst : f32 to vector<32x128xf32>
    %c0_2 = arith.constant 0 : index
    %c0_3 = arith.constant 0 : index
    %3 = vector.load %arg7[%c0_2, %c0_3] : memref<32x128xf32, #tpu.memory_space<vmem>>, vector<32x128xf32>
    tpu.vector_store %arg7[%c0_2, %c0_3], %2 {strides = array<i32>} : memref<32x128xf32, #tpu.memory_space<vmem>>, vector<32x128xf32>,
    %cst_4 = arith.constant 0.000000e+00 : f32
    %4 = vector.broadcast %cst_4 : f32 to vector<16x128xf32>
    %5 = arith.maximumf %1, %4 : vector<16x128xf32>
    %c8 = arith.constant 8 : index
    %c0_5 = arith.constant 0 : index
    %6 = vector.load %arg7[%c8, %c0_5] : memref<32x128xf32, #tpu.memory_space<vmem>>, vector<16x128xf32>
    tpu.vector_store %arg7[%c8, %c0_5], %5 {strides = array<i32>} : memref<32x128xf32, #tpu.memory_space<vmem>>, vector<16x128xf32>,
    %c6 = arith.constant 6 : index
    %c0_6 = arith.constant 0 : index
    %7 = vector.load %arg7[%c6, %c0_6] : memref<32x128xf32, #tpu.memory_space<vmem>>, vector<16x128xf32>
    %c8_7 = arith.constant 8 : index
    %c0_8 = arith.constant 0 : index
    %8 = vector.load %arg7[%c8_7, %c0_8] : memref<32x128xf32, #tpu.memory_space<vmem>>, vector<16x128xf32>
    %c10 = arith.constant 10 : index
    %c0_9 = arith.constant 0 : index
    %9 = vector.load %arg7[%c10, %c0_9] : memref<32x128xf32, #tpu.memory_space<vmem>>, vector<16x128xf32>
    %10 = tpu.concatenate %7, %8, %9 in 1 : vector<16x128xf32>, vector<16x128xf32>, vector<16x128xf32> -> vector<16x384xf32>
    %c0_10 = arith.constant 0 : index
    %c0_11 = arith.constant 0 : index
    %c0_12 = arith.constant 0 : index
    %11 = vector.load %arg2[%c0_10, %c0_11, %c0_12] : memref<2x384x128xf32, #tpu.memory_space<vmem>>, vector<1x384x128xf32>
    %12 = vector.shape_cast %11 : vector<1x384x128xf32> to vector<384x128xf32>
    %cst_13 = arith.constant dense<0.000000e+00> : vector<16x128xf32>
    %13 = tpu.matmul %10, %12, %cst_13 {dimension_numbers = #tpu.dot_dimension_numbers<[1], [0], [0], [1], [0, 0, 1, 1], [], []>} : vector<16x384xf32>, vector<384x128xf32>, vector<16x128xf32> -> vector<16x128xf32>
    %c0_14 = arith.constant 0 : index
    %c0_15 = arith.constant 0 : index
    %c0_16 = arith.constant 0 : index
    %14 = vector.load %arg3[%c0_14, %c0_15, %c0_16] : memref<2x1x128xf32, #tpu.memory_space<vmem>>, vector<1x1x128xf32>
    %15 = vector.shape_cast %14 : vector<1x1x128xf32> to vector<1x128xf32>
    %16 = vector.broadcast %15 : vector<1x128xf32> to vector<16x128xf32>
    %17 = arith.addf %13, %16 : vector<16x128xf32>
    %cst_17 = arith.constant 0.000000e+00 : f32
    %18 = vector.broadcast %cst_17 : f32 to vector<16x128xf32>
    %19 = arith.maximumf %17, %18 : vector<16x128xf32>
    %c0_18 = arith.constant 0 : index
    %c0_19 = arith.constant 0 : index
    %c0_20 = arith.constant 0 : index
    %20 = vector.load %arg4[%c0_18, %c0_19, %c0_20] : memref<2x128x128xf32, #tpu.memory_space<vmem>>, vector<1x128x128xf32>
    %21 = vector.shape_cast %20 : vector<1x128x128xf32> to vector<128x128xf32>
    %cst_21 = arith.constant dense<0.000000e+00> : vector<16x128xf32>
    %22 = tpu.matmul %19, %21, %cst_21 {dimension_numbers = #tpu.dot_dimension_numbers<[1], [0], [0], [1], [0, 0, 1, 1], [], []>} : vector<16x128xf32>, vector<128x128xf32>, vector<16x128xf32> -> vector<16x128xf32>
    %c0_22 = arith.constant 0 : index
    %c0_23 = arith.constant 0 : index
    %c0_24 = arith.constant 0 : index
    %23 = vector.load %arg5[%c0_22, %c0_23, %c0_24] : memref<2x1x128xf32, #tpu.memory_space<vmem>>, vector<1x1x128xf32>
    %24 = vector.shape_cast %23 : vector<1x1x128xf32> to vector<1x128xf32>
    %25 = vector.broadcast %24 : vector<1x128xf32> to vector<16x128xf32>
    %26 = arith.addf %22, %25 : vector<16x128xf32>
    %27 = arith.addf %26, %1 : vector<16x128xf32>
    %cst_25 = arith.constant 0.000000e+00 : f32
    %28 = vector.broadcast %cst_25 : f32 to vector<16x128xf32>
    %29 = arith.maximumf %27, %28 : vector<16x128xf32>
    %c8_26 = arith.constant 8 : index
    %c0_27 = arith.constant 0 : index
    %30 = vector.load %arg7[%c8_26, %c0_27] : memref<32x128xf32, #tpu.memory_space<vmem>>, vector<16x128xf32>
    tpu.vector_store %arg7[%c8_26, %c0_27], %29 {strides = array<i32>} : memref<32x128xf32, #tpu.memory_space<vmem>>, vector<16x128xf32>,
    %c7 = arith.constant 7 : index
    %c0_28 = arith.constant 0 : index
    %31 = vector.load %arg7[%c7, %c0_28] : memref<32x128xf32, #tpu.memory_space<vmem>>, vector<16x128xf32>
    %c8_29 = arith.constant 8 : index
    %c0_30 = arith.constant 0 : index
    %32 = vector.load %arg7[%c8_29, %c0_30] : memref<32x128xf32, #tpu.memory_space<vmem>>, vector<16x128xf32>
    %c9 = arith.constant 9 : index
    %c0_31 = arith.constant 0 : index
    %33 = vector.load %arg7[%c9, %c0_31] : memref<32x128xf32, #tpu.memory_space<vmem>>, vector<16x128xf32>
    %34 = tpu.concatenate %31, %32, %33 in 1 : vector<16x128xf32>, vector<16x128xf32>, vector<16x128xf32> -> vector<16x384xf32>
    %c1 = arith.constant 1 : index
    %c0_32 = arith.constant 0 : index
    %c0_33 = arith.constant 0 : index
    %35 = vector.load %arg2[%c1, %c0_32, %c0_33] : memref<2x384x128xf32, #tpu.memory_space<vmem>>, vector<1x384x128xf32>
    %36 = vector.shape_cast %35 : vector<1x384x128xf32> to vector<384x128xf32>
    %cst_34 = arith.constant dense<0.000000e+00> : vector<16x128xf32>
    %37 = tpu.matmul %34, %36, %cst_34 {dimension_numbers = #tpu.dot_dimension_numbers<[1], [0], [0], [1], [0, 0, 1, 1], [], []>} : vector<16x384xf32>, vector<384x128xf32>, vector<16x128xf32> -> vector<16x128xf32>
    %c1_35 = arith.constant 1 : index
    %c0_36 = arith.constant 0 : index
    %c0_37 = arith.constant 0 : index
    %38 = vector.load %arg3[%c1_35, %c0_36, %c0_37] : memref<2x1x128xf32, #tpu.memory_space<vmem>>, vector<1x1x128xf32>
    %39 = vector.shape_cast %38 : vector<1x1x128xf32> to vector<1x128xf32>
    %40 = vector.broadcast %39 : vector<1x128xf32> to vector<16x128xf32>
    %41 = arith.addf %37, %40 : vector<16x128xf32>
    %cst_38 = arith.constant 0.000000e+00 : f32
    %42 = vector.broadcast %cst_38 : f32 to vector<16x128xf32>
    %43 = arith.maximumf %41, %42 : vector<16x128xf32>
    %c1_39 = arith.constant 1 : index
    %c0_40 = arith.constant 0 : index
    %c0_41 = arith.constant 0 : index
    %44 = vector.load %arg4[%c1_39, %c0_40, %c0_41] : memref<2x128x128xf32, #tpu.memory_space<vmem>>, vector<1x128x128xf32>
    %45 = vector.shape_cast %44 : vector<1x128x128xf32> to vector<128x128xf32>
    %cst_42 = arith.constant dense<0.000000e+00> : vector<16x128xf32>
    %46 = tpu.matmul %43, %45, %cst_42 {dimension_numbers = #tpu.dot_dimension_numbers<[1], [0], [0], [1], [0, 0, 1, 1], [], []>} : vector<16x128xf32>, vector<128x128xf32>, vector<16x128xf32> -> vector<16x128xf32>
    %c1_43 = arith.constant 1 : index
    %c0_44 = arith.constant 0 : index
    %c0_45 = arith.constant 0 : index
    %47 = vector.load %arg5[%c1_43, %c0_44, %c0_45] : memref<2x1x128xf32, #tpu.memory_space<vmem>>, vector<1x1x128xf32>
    %48 = vector.shape_cast %47 : vector<1x1x128xf32> to vector<1x128xf32>
    %49 = vector.broadcast %48 : vector<1x128xf32> to vector<16x128xf32>
    %50 = arith.addf %46, %49 : vector<16x128xf32>
    %51 = arith.addf %50, %27 : vector<16x128xf32>
    %c0_46 = arith.constant 0 : index
    %c0_47 = arith.constant 0 : index
    %c0_48 = arith.constant 0 : index
    %52 = vector.load %arg6[%c0_46, %c0_47, %c0_48] : memref<1x16x128xf32, #tpu.memory_space<vmem>>, vector<1x16x128xf32>
    %53 = vector.shape_cast %52 : vector<1x16x128xf32> to vector<16x128xf32>
    %54 = vector.shape_cast %51 : vector<16x128xf32> to vector<1x16x128xf32>
    tpu.vector_store %arg6[%c0_46, %c0_47, %c0_48], %54 {strides = array<i32>} : memref<1x16x128xf32, #tpu.memory_space<vmem>>, vector<1x16x128xf32>,
    return
  }
  func.func @transform_0(%arg0: i32) -> (i32, i32, i32) {
    %c0_i32 = arith.constant 0 : i32
    %c0_i32_0 = arith.constant 0 : i32
    %c0_i32_1 = arith.constant 0 : i32
    return %arg0, %c0_i32, %c0_i32_0 : i32, i32, i32
  }
  func.func @transform_1(%arg0: i32) -> (i32, i32, i32) {
    %c0_i32 = arith.constant 0 : i32
    %c0_i32_0 = arith.constant 0 : i32
    %c0_i32_1 = arith.constant 0 : i32
    %c0_i32_2 = arith.constant 0 : i32
    return %c0_i32, %c0_i32_0, %c0_i32_1 : i32, i32, i32
  }
  func.func @transform_2(%arg0: i32) -> (i32, i32, i32) {
    %c0_i32 = arith.constant 0 : i32
    %c0_i32_0 = arith.constant 0 : i32
    %c0_i32_1 = arith.constant 0 : i32
    %c0_i32_2 = arith.constant 0 : i32
    return %c0_i32, %c0_i32_0, %c0_i32_1 : i32, i32, i32
  }
  func.func @transform_3(%arg0: i32) -> (i32, i32, i32) {
    %c0_i32 = arith.constant 0 : i32
    %c0_i32_0 = arith.constant 0 : i32
    %c0_i32_1 = arith.constant 0 : i32
    %c0_i32_2 = arith.constant 0 : i32
    return %c0_i32, %c0_i32_0, %c0_i32_1 : i32, i32, i32
  }
  func.func @transform_4(%arg0: i32) -> (i32, i32, i32) {
    %c0_i32 = arith.constant 0 : i32
    %c0_i32_0 = arith.constant 0 : i32
    %c0_i32_1 = arith.constant 0 : i32
    %c0_i32_2 = arith.constant 0 : i32
    return %c0_i32, %c0_i32_0, %c0_i32_1 : i32, i32, i32
  }
  func.func @transform_5(%arg0: i32) -> (i32, i32, i32) {
    %c0_i32 = arith.constant 0 : i32
    %c0_i32_0 = arith.constant 0 : i32
    %c0_i32_1 = arith.constant 0 : i32
    return %arg0, %c0_i32, %c0_i32_0 : i32, i32, i32
  }
}

</mosaic_0001>

<llo_original>
// kernel: tpu_custom_call.1
$region0: #{tpu_custom_call.1}
  #allocation0 [shape = 'u32[]', space=smem, size = 0x4, offset = 0x4, fixed_abs, tag = 'smem constant byte address 0x4 - core index']
  #allocation1 [shape = 'u32[72,128]{1,0:T(1,128)}', space=vmem, size = 0x9000, scoped, tag = 'internal scratch']
  #allocation2 [shape = 'f32[32,128]{1,0:T(8,128)}', space=vmem, size = 0x4000, scoped, tag = 'scratch operand']
  %s0 = inlined_call_operand.hbm [shape: f32[2,16,128], index: 0, kind: input, shape index: {}]
  %s1 = inlined_call_operand.hbm [shape: f32[2,384,128], index: 1, kind: input, shape index: {}]
  %s2 = inlined_call_operand.hbm [shape: f32[2,1,128], index: 2, kind: input, shape index: {}]
  %s3 = inlined_call_operand.hbm [shape: f32[2,128,128], index: 3, kind: input, shape index: {}]
  %s4 = inlined_call_operand.vmem [shape: f32[2,1,128], index: 4, kind: input, shape index: {}]
  %s5 = inlined_call_operand.hbm [shape: f32[2,16,128], index: 5, kind: output, shape index: {}]
  %s6 = sld [smem:[#allocation0]]
  $region69: #{tpu_custom_call.1} parent=0
    _
  %s8 = ssub.s32 1, %s6
  %s9 = scalar_select 0, %s8, %s6
  $region1: #{tpu_custom_call.1} parent=0
    #allocation3 [shape = 'u8[16384]{0}', space=vmem, size = 0x4000, scoped, tag = 'input window, operand 0']
    #allocation4 [shape = 's32[2]{0}', space=sflag, size = 0x8, scoped, tag = 'scoped memory for tpu_custom_call.1']
    #allocation5 [shape = 's32[2]{0}', space=sflag, size = 0x8, scoped, tag = 'scoped memory for tpu_custom_call.1']
    #allocation6 [shape = 'u8[393216]{0}', space=vmem, size = 0x60000, scoped, tag = 'input window, operand 1, single buffered']
    #allocation7 [shape = 's32[1]{0}', space=sflag, size = 0x4, scoped, tag = 'scoped memory for tpu_custom_call.1']
    #allocation8 [shape = 'u8[1024]{0}', space=vmem, size = 0x400, scoped, tag = 'input window, operand 2, single buffered']
    #allocation9 [shape = 'u8[131072]{0}', space=vmem, size = 0x20000, scoped, tag = 'input window, operand 3, single buffered']
    #allocation10 [shape = 's32[1]{0}', space=sflag, size = 0x4, scoped, tag = 'scoped memory for tpu_custom_call.1']
    #allocation11 [shape = 'u8[16384]{0}', space=vmem, size = 0x4000, scoped, tag = 'output window, operand 0']
    %10 = vsyncpa [#allocation4], 0
    %s11 = scalar_lea.sflag [#allocation4], 1
    %12 = vsyncpa %s11, 0
    %13 = vsyncpa [#allocation7], 0
    %14 = vsyncpa [#allocation10], 0
    %15 = vsyncpa [#allocation5], 0
    %s16 = scalar_lea.sflag [#allocation5], 1
    %17 = vsyncpa %s16, 0
    loop: start=0, step=1, limit=4
    $region2: #{tpu_custom_call.1} parent=1 // loop_pre_header
      _
    $region3: #{tpu_custom_call.1} parent=1 // loop_header
      %s19 = sphi 0, %s23
      %p20 = scmp.ge.s32.totalorder %s19, 4
      %s29 = sphi 0, %s31
      %s32 = sphi 0, %s29
      %s33 = sphi 0, %s32
      %s49 = sphi 0, %s33
      %s53 = sphi 0, %s53
      %s55 = sphi 0, %s53
      %s56 = sphi 0, %s55
      %s70 = sphi 0, %s56
      %s74 = sphi 0, %s74
      %s76 = sphi 0, %s74
      %s77 = sphi 0, %s76
      %s91 = sphi 0, %s77
      %s95 = sphi 0, %s95
      %s97 = sphi 0, %s95
      %s98 = sphi 0, %s97
      %s112 = sphi 0, %s98
      %s116 = sphi 0, %s116
      %s118 = sphi 0, %s116
      %s119 = sphi 0, %s118
      %s133 = sphi 0, %s119
      %s139 = sphi 0, %s141
      %s142 = sphi 0, %s139
      %s143 = sphi 0, %s142
      %s159 = sphi 0, %s143
    $region4: #{tpu_custom_call.1} parent=1 // loop_header_branch
      %22 = sbr.rel (%p20) target = $region8
    $region5: #{tpu_custom_call.1} parent=1 // loop_body
      %s24 = ssub.s32 %s19, 1
      %s25 = ssub.s32 %s19, 2
      %s26 = sadd.s32 %s19, 1
      %s27 = ssub.s32 %s19, %s26
      %p28 = scmp.eq.s32.totalorder %s27, 0
      %s30 = sadd.s32 %s29, 1
      %s31 = scalar_select %p28, %s29, %s30
      %p34 = pneg %p28
      %p35 = scmp.eq.s32.totalorder %s19, 1
      %p36 = por %p34, %p35
      %p37 = scmp.ne.s32.totalorder %s29, %s32
      %p38 = scmp.eq.s32.totalorder %s19, 0
      %p39 = por %p37, %p38
      %p40 = scmp.ne.s32.totalorder %s29, %s32
      %p41 = scmp.eq.s32.totalorder %s24, 1
      %p42 = por %p40, %p41
      %p43 = scmp.ne.s32.totalorder %s32, %s33
      %p44 = scmp.eq.s32.totalorder %s24, 0
      %p45 = por %p43, %p44
      %p46 = scmp.ne.s32.totalorder %s32, %s33
      %p47 = scmp.eq.s32.totalorder %s25, 1
      %p48 = por %p46, %p47
      %p50 = scmp.ne.s32.totalorder %s33, %s49
      %p51 = scmp.eq.s32.totalorder %s25, 0
      %p52 = por %p50, %p51
      %s54 = sadd.s32 %s53, 1
      %p57 = scmp.eq.s32.totalorder %s19, 1
      %p58 = scmp.ne.s32.totalorder %s53, %s55
      %p59 = scmp.eq.s32.totalorder %s19, 0
      %p60 = por %p58, %p59
      %p61 = scmp.ne.s32.totalorder %s53, %s55
      %p62 = scmp.eq.s32.totalorder %s24, 1
      %p63 = por %p61, %p62
      %p64 = scmp.ne.s32.totalorder %s55, %s56
      %p65 = scmp.eq.s32.totalorder %s24, 0
      %p66 = por %p64, %p65
      %p67 = scmp.ne.s32.totalorder %s55, %s56
      %p68 = scmp.eq.s32.totalorder %s25, 1
      %p69 = por %p67, %p68
      %p71 = scmp.ne.s32.totalorder %s56, %s70
      %p72 = scmp.eq.s32.totalorder %s25, 0
      %p73 = por %p71, %p72
      %s75 = sadd.s32 %s74, 1
      %p78 = scmp.eq.s32.totalorder %s19, 1
      %p79 = scmp.ne.s32.totalorder %s74, %s76
      %p80 = scmp.eq.s32.totalorder %s19, 0
      %p81 = por %p79, %p80
      %p82 = scmp.ne.s32.totalorder %s74, %s76
      %p83 = scmp.eq.s32.totalorder %s24, 1
      %p84 = por %p82, %p83
      %p85 = scmp.ne.s32.totalorder %s76, %s77
      %p86 = scmp.eq.s32.totalorder %s24, 0
      %p87 = por %p85, %p86
      %p88 = scmp.ne.s32.totalorder %s76, %s77
      %p89 = scmp.eq.s32.totalorder %s25, 1
      %p90 = por %p88, %p89
      %p92 = scmp.ne.s32.totalorder %s77, %s91
      %p93 = scmp.eq.s32.totalorder %s25, 0
      %p94 = por %p92, %p93
      %s96 = sadd.s32 %s95, 1
      %p99 = scmp.eq.s32.totalorder %s19, 1
      %p100 = scmp.ne.s32.totalorder %s95, %s97
      %p101 = scmp.eq.s32.totalorder %s19, 0
      %p102 = por %p100, %p101
      %p103 = scmp.ne.s32.totalorder %s95, %s97
      %p104 = scmp.eq.s32.totalorder %s24, 1
      %p105 = por %p103, %p104
      %p106 = scmp.ne.s32.totalorder %s97, %s98
      %p107 = scmp.eq.s32.totalorder %s24, 0
      %p108 = por %p106, %p107
      %p109 = scmp.ne.s32.totalorder %s97, %s98
      %p110 = scmp.eq.s32.totalorder %s25, 1
      %p111 = por %p109, %p110
      %p113 = scmp.ne.s32.totalorder %s98, %s112
      %p114 = scmp.eq.s32.totalorder %s25, 0
      %p115 = por %p113, %p114
      %s117 = sadd.s32 %s116, 1
      %p120 = scmp.eq.s32.totalorder %s19, 1
      %p121 = scmp.ne.s32.totalorder %s116, %s118
      %p122 = scmp.eq.s32.totalorder %s19, 0
      %p123 = por %p121, %p122
      %p124 = scmp.ne.s32.totalorder %s116, %s118
      %p125 = scmp.eq.s32.totalorder %s24, 1
      %p126 = por %p124, %p125
      %p127 = scmp.ne.s32.totalorder %s118, %s119
      %p128 = scmp.eq.s32.totalorder %s24, 0
      %p129 = por %p127, %p128
      %p130 = scmp.ne.s32.totalorder %s118, %s119
      %p131 = scmp.eq.s32.totalorder %s25, 1
      %p132 = por %p130, %p131
      %p134 = scmp.ne.s32.totalorder %s119, %s133
      %p135 = scmp.eq.s32.totalorder %s25, 0
      %p136 = por %p134, %p135
      %s137 = ssub.s32 %s19, %s26
      %p138 = scmp.eq.s32.totalorder %s137, 0
      %s140 = sadd.s32 %s139, 1
      %s141 = scalar_select %p138, %s139, %s140
      %p144 = pneg %p138
      %p145 = scmp.eq.s32.totalorder %s19, 1
      %p146 = por %p144, %p145
      %p147 = scmp.ne.s32.totalorder %s139, %s142
      %p148 = scmp.eq.s32.totalorder %s19, 0
      %p149 = por %p147, %p148
      %p150 = scmp.ne.s32.totalorder %s139, %s142
      %p151 = scmp.eq.s32.totalorder %s24, 1
      %p152 = por %p150, %p151
      %p153 = scmp.ne.s32.totalorder %s142, %s143
      %p154 = scmp.eq.s32.totalorder %s24, 0
      %p155 = por %p153, %p154
      %p156 = scmp.ne.s32.totalorder %s142, %s143
      %p157 = scmp.eq.s32.totalorder %s25, 1
      %p158 = por %p156, %p157
      %p160 = scmp.ne.s32.totalorder %s143, %s159
      %p161 = scmp.eq.s32.totalorder %s25, 0
      %p162 = por %p160, %p161
      %p163 = scmp.le.s32.totalorder 1, %s19
      %p164 = scmp.lt.s32.totalorder %s19, 3
      %p165 = pnand %p163, %p164
      %p166 = pneg %p165
      // Predicated region
      $region9: #{tpu_custom_call.1} parent=5 // pred_check
        _
      $region10: #{tpu_custom_call.1} parent=5 // pred_check_branch
        %168 = sbr.rel (%p165) target = $region12
      $region11: #{tpu_custom_call.1} parent=5 // pred_region
        %s169 = ssub.s32 %s19, 1
        // Predicated region
        $region13: #{tpu_custom_call.1} parent=11 // pred_check
          %p170 = pneg %p66
        $region14: #{tpu_custom_call.1} parent=11 // pred_check_branch
          %172 = sbr.rel (%p170) target = $region16
        $region15: #{tpu_custom_call.1} parent=11 // pred_region
          %174 = vsyncadd [#allocation7], 0
          %s175 = sshll.u32 %s1, 4
          %s176 = int_to_ptr.hbm [resolvable:$true] %s175
          %s177 = sshll.u32 [#allocation6], 4
          %s178 = int_to_ptr.vmem [resolvable:$true] %s177
          %183 = dma.hbm_to_vmem [thread:$0]  %s176, 12288, %s178, [#allocation7], 128, 128, 8
        $region16: #{tpu_custom_call.1} parent=11 // pred_fallthru
          _
        // Predicated region
        $region17: #{tpu_custom_call.1} parent=11 // pred_check
          %p184 = pneg %p87
        $region18: #{tpu_custom_call.1} parent=11 // pred_check_branch
          %186 = sbr.rel (%p184) target = $region20
        $region19: #{tpu_custom_call.1} parent=11 // pred_region
          %188 = vsyncadd [#allocation7], 0
          %s189 = sshll.u32 %s2, 4
          %s190 = int_to_ptr.hbm [resolvable:$true] %s189
          %s191 = sshll.u32 [#allocation8], 4
          %s192 = int_to_ptr.vmem [resolvable:$true] %s191
          %197 = dma.hbm_to_vmem [thread:$0]  %s190, 32, %s192, [#allocation7], 16, 16, 1
        $region20: #{tpu_custom_call.1} parent=11 // pred_fallthru
          _
        // Predicated region
        $region21: #{tpu_custom_call.1} parent=11 // pred_check
          %p198 = pneg %p108
        $region22: #{tpu_custom_call.1} parent=11 // pred_check_branch
          %200 = sbr.rel (%p198) target = $region24
        $region23: #{tpu_custom_call.1} parent=11 // pred_region
          %202 = vsyncadd [#allocation10], 0
          %s203 = sshll.u32 %s3, 4
          %s204 = int_to_ptr.hbm [resolvable:$true] %s203
          %s205 = sshll.u32 [#allocation9], 4
          %s206 = int_to_ptr.vmem [resolvable:$true] %s205
          %211 = dma.hbm_to_vmem [thread:$0]  %s204, 4096, %s206, [#allocation10], 128, 128, 8
        $region24: #{tpu_custom_call.1} parent=11 // pred_fallthru
          _
        // Predicated region
        $region25: #{tpu_custom_call.1} parent=11 // pred_check
          %p212 = pneg %p129
        $region26: #{tpu_custom_call.1} parent=11 // pred_check_branch
          %214 = sbr.rel (%p212) target = $region28
        $region27: #{tpu_custom_call.1} parent=11 // pred_region
          _
        $region28: #{tpu_custom_call.1} parent=11 // pred_fallthru
          _
      $region12: #{tpu_custom_call.1} parent=5 // pred_fallthru
        _
      %p215 = scmp.lt.s32.totalorder %s19, 2
      // Predicated region
      $region29: #{tpu_custom_call.1} parent=5 // pred_check
        %p216 = pneg %p215
      $region30: #{tpu_custom_call.1} parent=5 // pred_check_branch
        %218 = sbr.rel (%p216) target = $region32
      $region31: #{tpu_custom_call.1} parent=5 // pred_region
        // Predicated region
        $region33: #{tpu_custom_call.1} parent=31 // pred_check
          %p219 = pneg %p39
        $region34: #{tpu_custom_call.1} parent=31 // pred_check_branch
          %221 = sbr.rel (%p219) target = $region36
        $region35: #{tpu_custom_call.1} parent=31 // pred_region
          %s222 = sand.u32 %s29, 1
          %s223 = scalar_lea.sflag [#allocation4], %s222
          %s224 = sand.u32 %s29, 1
          %s225 = smul.addr %s224, 16
          %s226 = scalar_lea.vmem [#allocation3], %s225
          %228 = vsyncadd %s223, 0
          %s229 = smul.addr %s19, 2
          %s230 = smul.addr %s229, 8
          %s231 = scalar_lea.hbm %s0, %s230
          %s232 = sshll.u32 %s231, 4
          %s233 = int_to_ptr.hbm [resolvable:$true] %s232
          %s234 = sshll.u32 %s226, 4
          %s235 = int_to_ptr.vmem [resolvable:$true] %s234
          %240 = dma.hbm_to_vmem [thread:$0]  %s233, 256, %s235, %s223, 128, 128, 8
        $region36: #{tpu_custom_call.1} parent=31 // pred_fallthru
          _
      $region32: #{tpu_custom_call.1} parent=5 // pred_fallthru
        _
      %p241 = scmp.le.s32.totalorder 1, %s19
      %p242 = scmp.lt.s32.totalorder %s19, 3
      %p243 = pnand %p241, %p242
      %p244 = pneg %p243
      // Predicated region
      $region37: #{tpu_custom_call.1} parent=5 // pred_check
        _
      $region38: #{tpu_custom_call.1} parent=5 // pred_check_branch
        %246 = sbr.rel (%p243) target = $region40
      $region39: #{tpu_custom_call.1} parent=5 // pred_region
        %s247 = ssub.s32 %s19, 1
        %s248 = sand.u32 %s32, 1
        %s249 = scalar_lea.sflag [#allocation4], %s248
        %s250 = sand.u32 %s32, 1
        %s251 = smul.addr %s250, 16
        %s252 = scalar_lea.vmem [#allocation3], %s251
        // Predicated region
        $region41: #{tpu_custom_call.1} parent=39 // pred_check
          %p253 = pneg %p45
        $region42: #{tpu_custom_call.1} parent=39 // pred_check_branch
          %255 = sbr.rel (%p253) target = $region44
        $region43: #{tpu_custom_call.1} parent=39 // pred_region
          %257 = dma.done %s249, 256
        $region44: #{tpu_custom_call.1} parent=39 // pred_fallthru
          _
        // Predicated region
        $region45: #{tpu_custom_call.1} parent=39 // pred_check
          %p258 = pneg %p66
        $region46: #{tpu_custom_call.1} parent=39 // pred_check_branch
          %260 = sbr.rel (%p258) target = $region48
        $region47: #{tpu_custom_call.1} parent=39 // pred_region
          %262 = dma.done [#allocation7], 12288
        $region48: #{tpu_custom_call.1} parent=39 // pred_fallthru
          _
        // Predicated region
        $region49: #{tpu_custom_call.1} parent=39 // pred_check
          %p263 = pneg %p87
        $region50: #{tpu_custom_call.1} parent=39 // pred_check_branch
          %265 = sbr.rel (%p263) target = $region52
        $region51: #{tpu_custom_call.1} parent=39 // pred_region
          %267 = dma.done [#allocation7], 32
        $region52: #{tpu_custom_call.1} parent=39 // pred_fallthru
          _
        // Predicated region
        $region53: #{tpu_custom_call.1} parent=39 // pred_check
          %p268 = pneg %p108
        $region54: #{tpu_custom_call.1} parent=39 // pred_check_branch
          %270 = sbr.rel (%p268) target = $region56
        $region55: #{tpu_custom_call.1} parent=39 // pred_region
          %272 = dma.done [#allocation10], 4096
        $region56: #{tpu_custom_call.1} parent=39 // pred_fallthru
          _
        %s273 = sand.u32 %s32, 1
        %s274 = scalar_lea.sflag [#allocation4], %s273
        %s275 = sand.u32 %s32, 1
        %s276 = smul.addr %s275, 16
        %s277 = scalar_lea.vmem [#allocation3], %s276
        %p278 = pneg %p45
        %p279 = pneg %p42
        %p280 = pneg %p66
        %p281 = pneg %p63
        %p282 = pneg %p87
        %p283 = pneg %p84
        %p284 = pneg %p108
        %p285 = pneg %p105
        %p286 = pneg %p129
        %p287 = pneg %p126
        %p288 = pneg %p155
        %p289 = pneg %p152
        %s290 = sand.u32 %s142, 1
        %s291 = scalar_lea.sflag [#allocation5], %s290
        %s292 = sand.u32 %s142, 1
        %s293 = smul.addr %s292, 16
        %s294 = scalar_lea.vmem [#allocation11], %s293
        %v295 = vld [vmem:[%s252] sm:$0xff]
        %v296 = vld [vmem:[%s252 + $0x8] sm:$0xff]
        %297 = vst [vmem:[#allocation2] sm:$0xff] 0.0
        %298 = vst [vmem:[#allocation2 + $0x8] sm:$0xff] 0.0
        %299 = vst [vmem:[#allocation2 + $0x10] sm:$0xff] 0.0
        %300 = vst [vmem:[#allocation2 + $0x18] sm:$0xff] 0.0
        %v301 = vmax.f32 %v295, 0.0
        %v302 = vmax.f32 %v296, 0.0
        %303 = vst [vmem:[#allocation2 + $0x8] sm:$0xff] %v301
        %304 = vst [vmem:[#allocation2 + $0x10] sm:$0xff] %v302
        %v305 = vld [vmem:[#allocation2 + $0x6] sm:$0xff]
        %v306 = vld [vmem:[#allocation2 + $0xe] sm:$0xff]
        %v307 = vld [vmem:[#allocation2 + $0x8] sm:$0xff]
        %v308 = vld [vmem:[#allocation2 + $0x10] sm:$0xff]
        %v309 = vld [vmem:[#allocation2 + $0xa] sm:$0xff]
        %v310 = vld [vmem:[#allocation2 + $0x12] sm:$0xff]
        %v311 = vld [vmem:[#allocation6] sm:$0xff]
        %v312 = vld [vmem:[#allocation6 + $0x8] sm:$0xff]
        %v313 = vld [vmem:[#allocation6 + $0x10] sm:$0xff]
        %v314 = vld [vmem:[#allocation6 + $0x18] sm:$0xff]
        %v315 = vld [vmem:[#allocation6 + $0x20] sm:$0xff]
        %v316 = vld [vmem:[#allocation6 + $0x28] sm:$0xff]
        %v317 = vld [vmem:[#allocation6 + $0x30] sm:$0xff]
        %v318 = vld [vmem:[#allocation6 + $0x38] sm:$0xff]
        %v319 = vld [vmem:[#allocation6 + $0x40] sm:$0xff]
        %v320 = vld [vmem:[#allocation6 + $0x48] sm:$0xff]
        %v321 = vld [vmem:[#allocation6 + $0x50] sm:$0xff]
        %v322 = vld [vmem:[#allocation6 + $0x58] sm:$0xff]
        %v323 = vld [vmem:[#allocation6 + $0x60] sm:$0xff]
        %v324 = vld [vmem:[#allocation6 + $0x68] sm:$0xff]
        %v325 = vld [vmem:[#allocation6 + $0x70] sm:$0xff]
        %v326 = vld [vmem:[#allocation6 + $0x78] sm:$0xff]
        %v327 = vld [vmem:[#allocation6 + $0x80] sm:$0xff]
        %v328 = vld [vmem:[#allocation6 + $0x88] sm:$0xff]
        %v329 = vld [vmem:[#allocation6 + $0x90] sm:$0xff]
        %v330 = vld [vmem:[#allocation6 + $0x98] sm:$0xff]
        %v331 = vld [vmem:[#allocation6 + $0xa0] sm:$0xff]
        %v332 = vld [vmem:[#allocation6 + $0xa8] sm:$0xff]
        %v333 = vld [vmem:[#allocation6 + $0xb0] sm:$0xff]
        %v334 = vld [vmem:[#allocation6 + $0xb8] sm:$0xff]
        %v335 = vld [vmem:[#allocation6 + $0xc0] sm:$0xff]
        %v336 = vld [vmem:[#allocation6 + $0xc8] sm:$0xff]
        %v337 = vld [vmem:[#allocation6 + $0xd0] sm:$0xff]
        %v338 = vld [vmem:[#allocation6 + $0xd8] sm:$0xff]
        %v339 = vld [vmem:[#allocation6 + $0xe0] sm:$0xff]
        %v340 = vld [vmem:[#allocation6 + $0xe8] sm:$0xff]
        %v341 = vld [vmem:[#allocation6 + $0xf0] sm:$0xff]
        %v342 = vld [vmem:[#allocation6 + $0xf8] sm:$0xff]
        %v343 = vld [vmem:[#allocation6 + $0x100] sm:$0xff]
        %v344 = vld [vmem:[#allocation6 + $0x108] sm:$0xff]
        %v345 = vld [vmem:[#allocation6 + $0x110] sm:$0xff]
        %v346 = vld [vmem:[#allocation6 + $0x118] sm:$0xff]
        %v347 = vld [vmem:[#allocation6 + $0x120] sm:$0xff]
        %v348 = vld [vmem:[#allocation6 + $0x128] sm:$0xff]
        %v349 = vld [vmem:[#allocation6 + $0x130] sm:$0xff]
        %v350 = vld [vmem:[#allocation6 + $0x138] sm:$0xff]
        %v351 = vld [vmem:[#allocation6 + $0x140] sm:$0xff]
        %v352 = vld [vmem:[#allocation6 + $0x148] sm:$0xff]
        %v353 = vld [vmem:[#allocation6 + $0x150] sm:$0xff]
        %v354 = vld [vmem:[#allocation6 + $0x158] sm:$0xff]
        %v355 = vld [vmem:[#allocation6 + $0x160] sm:$0xff]
        %v356 = vld [vmem:[#allocation6 + $0x168] sm:$0xff]
        %v357 = vld [vmem:[#allocation6 + $0x170] sm:$0xff]
        %v358 = vld [vmem:[#allocation6 + $0x178] sm:$0xff]
        %v359 = vld [vmem:[#allocation8] sm:$0x1]
        %v361 = vperm.slane %v359, 0
        %363 = vmatpush.msra.mxu0 %v326
        %364 = vmatpush.msra.mxu0 %v325
        %365 = vmatpush.msra.mxu0 %v324
        %366 = vmatpush.msra.mxu0 %v323
        %367 = vmatpush.msra.mxu0 %v322
        %368 = vmatpush.msra.mxu0 %v321
        %369 = vmatpush.msra.mxu0 %v320
        %370 = vmatpush.msra.mxu0 %v319
        %371 = vmatpush.msra.mxu0 %v318
        %372 = vmatpush.msra.mxu0 %v317
        %373 = vmatpush.msra.mxu0 %v316
        %374 = vmatpush.msra.mxu0 %v315
        %375 = vmatpush.msra.mxu0 %v314
        %376 = vmatpush.msra.mxu0 %v313
        %377 = vmatpush.msra.mxu0 %v312
        %378 = vmatpush.msra.mxu0 %v311
        %379 = vmatmul.f32.gmra.mxu0 %v305
        %v380 = vpop.f32.mrf.mxu0
        %v381 = vadd.f32 %v361, %v380
        %382 = vmatmul.f32.gmra.mxu0 %v306
        %v383 = vpop.f32.mrf.mxu0
        %v384 = vadd.f32 %v361, %v383
        %385 = vdwg.mxu0
        %386 = vmatpush.msra.mxu0 %v342
        %387 = vmatpush.msra.mxu0 %v341
        %388 = vmatpush.msra.mxu0 %v340
        %389 = vmatpush.msra.mxu0 %v339
        %390 = vmatpush.msra.mxu0 %v338
        %391 = vmatpush.msra.mxu0 %v337
        %392 = vmatpush.msra.mxu0 %v336
        %393 = vmatpush.msra.mxu0 %v335
        %394 = vmatpush.msra.mxu0 %v334
        %395 = vmatpush.msra.mxu0 %v333
        %396 = vmatpush.msra.mxu0 %v332
        %397 = vmatpush.msra.mxu0 %v331
        %398 = vmatpush.msra.mxu0 %v330
        %399 = vmatpush.msra.mxu0 %v329
        %400 = vmatpush.msra.mxu0 %v328
        %401 = vmatpush.msra.mxu0 %v327
        %402 = vmatmul.f32.gmra.mxu0 %v307
        %v403 = vpop.f32.mrf.mxu0
        %v404 = vadd.f32 %v381, %v403
        %405 = vmatmul.f32.gmra.mxu0 %v308
        %v406 = vpop.f32.mrf.mxu0
        %v407 = vadd.f32 %v384, %v406
        %408 = vdwg.mxu0
        %409 = vmatpush.msra.mxu0 %v358
        %410 = vmatpush.msra.mxu0 %v357
        %411 = vmatpush.msra.mxu0 %v356
        %412 = vmatpush.msra.mxu0 %v355
        %413 = vmatpush.msra.mxu0 %v354
        %414 = vmatpush.msra.mxu0 %v353
        %415 = vmatpush.msra.mxu0 %v352
        %416 = vmatpush.msra.mxu0 %v351
        %417 = vmatpush.msra.mxu0 %v350
        %418 = vmatpush.msra.mxu0 %v349
        %419 = vmatpush.msra.mxu0 %v348
        %420 = vmatpush.msra.mxu0 %v347
        %421 = vmatpush.msra.mxu0 %v346
        %422 = vmatpush.msra.mxu0 %v345
        %423 = vmatpush.msra.mxu0 %v344
        %424 = vmatpush.msra.mxu0 %v343
        %425 = vmatmul.f32.gmra.mxu0 %v309
        %v426 = vpop.f32.mrf.mxu0
        %v427 = vadd.f32 %v404, %v426
        %428 = vmatmul.f32.gmra.mxu0 %v310
        %v429 = vpop.f32.mrf.mxu0
        %v430 = vadd.f32 %v407, %v429
        %431 = vdwg.mxu0
        %v432 = vmax.f32 %v427, 0.0
        %v433 = vmax.f32 %v430, 0.0
        %v434 = vld [vmem:[#allocation9] sm:$0xff]
        %v435 = vld [vmem:[#allocation9 + $0x8] sm:$0xff]
        %v436 = vld [vmem:[#allocation9 + $0x10] sm:$0xff]
        %v437 = vld [vmem:[#allocation9 + $0x18] sm:$0xff]
        %v438 = vld [vmem:[#allocation9 + $0x20] sm:$0xff]
        %v439 = vld [vmem:[#allocation9 + $0x28] sm:$0xff]
        %v440 = vld [vmem:[#allocation9 + $0x30] sm:$0xff]
        %v441 = vld [vmem:[#allocation9 + $0x38] sm:$0xff]
        %v442 = vld [vmem:[#allocation9 + $0x40] sm:$0xff]
        %v443 = vld [vmem:[#allocation9 + $0x48] sm:$0xff]
        %v444 = vld [vmem:[#allocation9 + $0x50] sm:$0xff]
        %v445 = vld [vmem:[#allocation9 + $0x58] sm:$0xff]
        %v446 = vld [vmem:[#allocation9 + $0x60] sm:$0xff]
        %v447 = vld [vmem:[#allocation9 + $0x68] sm:$0xff]
        %v448 = vld [vmem:[#allocation9 + $0x70] sm:$0xff]
        %v449 = vld [vmem:[#allocation9 + $0x78] sm:$0xff]
        %v450 = vld [vmem:[%s4] sm:$0x1]
        %v452 = vperm.slane %v450, 0
        %454 = vmatpush.msra.mxu0 %v449
        %455 = vmatpush.msra.mxu0 %v448
        %456 = vmatpush.msra.mxu0 %v447
        %457 = vmatpush.msra.mxu0 %v446
        %458 = vmatpush.msra.mxu0 %v445
        %459 = vmatpush.msra.mxu0 %v444
        %460 = vmatpush.msra.mxu0 %v443
        %461 = vmatpush.msra.mxu0 %v442
        %462 = vmatpush.msra.mxu0 %v441
        %463 = vmatpush.msra.mxu0 %v440
        %464 = vmatpush.msra.mxu0 %v439
        %465 = vmatpush.msra.mxu0 %v438
        %466 = vmatpush.msra.mxu0 %v437
        %467 = vmatpush.msra.mxu0 %v436
        %468 = vmatpush.msra.mxu0 %v435
        %469 = vmatpush.msra.mxu0 %v434
        %470 = vmatmul.f32.gmra.mxu0 %v432
        %v471 = vpop.f32.mrf.mxu0
        %v472 = vadd.f32 %v452, %v471
        %473 = vmatmul.f32.gmra.mxu0 %v433
        %v474 = vpop.f32.mrf.mxu0
        %v475 = vadd.f32 %v452, %v474
        %476 = vdwg.mxu0
        %v477 = vadd.f32 %v472, %v295
        %v478 = vadd.f32 %v475, %v296
        %v479 = vmax.f32 %v477, 0.0
        %v480 = vmax.f32 %v478, 0.0
        %481 = vst [vmem:[#allocation2 + $0x8] sm:$0xff] %v479
        %482 = vst [vmem:[#allocation2 + $0x10] sm:$0xff] %v480
        %v483 = vld [vmem:[#allocation2 + $0x7] sm:$0xff]
        %v484 = vld [vmem:[#allocation2 + $0xf] sm:$0xff]
        %v485 = vld [vmem:[#allocation2 + $0x8] sm:$0xff]
        %v486 = vld [vmem:[#allocation2 + $0x10] sm:$0xff]
        %v487 = vld [vmem:[#allocation2 + $0x9] sm:$0xff]
        %v488 = vld [vmem:[#allocation2 + $0x11] sm:$0xff]
        %s489 = scalar_lea.vmem [#allocation6], 384
        %v490 = vld [vmem:[%s489] sm:$0xff]
        %v491 = vld [vmem:[%s489 + $0x8] sm:$0xff]
        %v492 = vld [vmem:[%s489 + $0x10] sm:$0xff]
        %v493 = vld [vmem:[%s489 + $0x18] sm:$0xff]
        %v494 = vld [vmem:[%s489 + $0x20] sm:$0xff]
        %v495 = vld [vmem:[%s489 + $0x28] sm:$0xff]
        %v496 = vld [vmem:[%s489 + $0x30] sm:$0xff]
        %v497 = vld [vmem:[%s489 + $0x38] sm:$0xff]
        %v498 = vld [vmem:[%s489 + $0x40] sm:$0xff]
        %v499 = vld [vmem:[%s489 + $0x48] sm:$0xff]
        %v500 = vld [vmem:[%s489 + $0x50] sm:$0xff]
        %v501 = vld [vmem:[%s489 + $0x58] sm:$0xff]
        %v502 = vld [vmem:[%s489 + $0x60] sm:$0xff]
        %v503 = vld [vmem:[%s489 + $0x68] sm:$0xff]
        %v504 = vld [vmem:[%s489 + $0x70] sm:$0xff]
        %v505 = vld [vmem:[%s489 + $0x78] sm:$0xff]
        %v506 = vld [vmem:[%s489 + $0x80] sm:$0xff]
        %v507 = vld [vmem:[%s489 + $0x88] sm:$0xff]
        %v508 = vld [vmem:[%s489 + $0x90] sm:$0xff]
        %v509 = vld [vmem:[%s489 + $0x98] sm:$0xff]
        %v510 = vld [vmem:[%s489 + $0xa0] sm:$0xff]
        %v511 = vld [vmem:[%s489 + $0xa8] sm:$0xff]
        %v512 = vld [vmem:[%s489 + $0xb0] sm:$0xff]
        %v513 = vld [vmem:[%s489 + $0xb8] sm:$0xff]
        %v514 = vld [vmem:[%s489 + $0xc0] sm:$0xff]
        %v515 = vld [vmem:[%s489 + $0xc8] sm:$0xff]
        %v516 = vld [vmem:[%s489 + $0xd0] sm:$0xff]
        %v517 = vld [vmem:[%s489 + $0xd8] sm:$0xff]
        %v518 = vld [vmem:[%s489 + $0xe0] sm:$0xff]
        %v519 = vld [vmem:[%s489 + $0xe8] sm:$0xff]
        %v520 = vld [vmem:[%s489 + $0xf0] sm:$0xff]
        %v521 = vld [vmem:[%s489 + $0xf8] sm:$0xff]
        %v522 = vld [vmem:[%s489 + $0x100] sm:$0xff]
        %v523 = vld [vmem:[%s489 + $0x108] sm:$0xff]
        %v524 = vld [vmem:[%s489 + $0x110] sm:$0xff]
        %v525 = vld [vmem:[%s489 + $0x118] sm:$0xff]
        %v526 = vld [vmem:[%s489 + $0x120] sm:$0xff]
        %v527 = vld [vmem:[%s489 + $0x128] sm:$0xff]
        %v528 = vld [vmem:[%s489 + $0x130] sm:$0xff]
        %v529 = vld [vmem:[%s489 + $0x138] sm:$0xff]
        %v530 = vld [vmem:[%s489 + $0x140] sm:$0xff]
        %v531 = vld [vmem:[%s489 + $0x148] sm:$0xff]
        %v532 = vld [vmem:[%s489 + $0x150] sm:$0xff]
        %v533 = vld [vmem:[%s489 + $0x158] sm:$0xff]
        %v534 = vld [vmem:[%s489 + $0x160] sm:$0xff]
        %v535 = vld [vmem:[%s489 + $0x168] sm:$0xff]
        %v536 = vld [vmem:[%s489 + $0x170] sm:$0xff]
        %v537 = vld [vmem:[%s489 + $0x178] sm:$0xff]
        %s538 = scalar_lea.vmem [#allocation8], 1
        %v539 = vld [vmem:[%s538] sm:$0x1]
        %v541 = vperm.slane %v539, 0
        %543 = vmatpush.msra.mxu0 %v505
        %544 = vmatpush.msra.mxu0 %v504
        %545 = vmatpush.msra.mxu0 %v503
        %546 = vmatpush.msra.mxu0 %v502
        %547 = vmatpush.msra.mxu0 %v501
        %548 = vmatpush.msra.mxu0 %v500
        %549 = vmatpush.msra.mxu0 %v499
        %550 = vmatpush.msra.mxu0 %v498
        %551 = vmatpush.msra.mxu0 %v497
        %552 = vmatpush.msra.mxu0 %v496
        %553 = vmatpush.msra.mxu0 %v495
        %554 = vmatpush.msra.mxu0 %v494
        %555 = vmatpush.msra.mxu0 %v493
        %556 = vmatpush.msra.mxu0 %v492
        %557 = vmatpush.msra.mxu0 %v491
        %558 = vmatpush.msra.mxu0 %v490
        %559 = vmatmul.f32.gmra.mxu0 %v483
        %v560 = vpop.f32.mrf.mxu0
        %v561 = vadd.f32 %v541, %v560
        %562 = vmatmul.f32.gmra.mxu0 %v484
        %v563 = vpop.f32.mrf.mxu0
        %v564 = vadd.f32 %v541, %v563
        %565 = vdwg.mxu0
        %566 = vmatpush.msra.mxu0 %v521
        %567 = vmatpush.msra.mxu0 %v520
        %568 = vmatpush.msra.mxu0 %v519
        %569 = vmatpush.msra.mxu0 %v518
        %570 = vmatpush.msra.mxu0 %v517
        %571 = vmatpush.msra.mxu0 %v516
        %572 = vmatpush.msra.mxu0 %v515
        %573 = vmatpush.msra.mxu0 %v514
        %574 = vmatpush.msra.mxu0 %v513
        %575 = vmatpush.msra.mxu0 %v512
        %576 = vmatpush.msra.mxu0 %v511
        %577 = vmatpush.msra.mxu0 %v510
        %578 = vmatpush.msra.mxu0 %v509
        %579 = vmatpush.msra.mxu0 %v508
        %580 = vmatpush.msra.mxu0 %v507
        %581 = vmatpush.msra.mxu0 %v506
        %582 = vmatmul.f32.gmra.mxu0 %v485
        %v583 = vpop.f32.mrf.mxu0
        %v584 = vadd.f32 %v561, %v583
        %585 = vmatmul.f32.gmra.mxu0 %v486
        %v586 = vpop.f32.mrf.mxu0
        %v587 = vadd.f32 %v564, %v586
        %588 = vdwg.mxu0
        %589 = vmatpush.msra.mxu0 %v537
        %590 = vmatpush.msra.mxu0 %v536
        %591 = vmatpush.msra.mxu0 %v535
        %592 = vmatpush.msra.mxu0 %v534
        %593 = vmatpush.msra.mxu0 %v533
        %594 = vmatpush.msra.mxu0 %v532
        %595 = vmatpush.msra.mxu0 %v531
        %596 = vmatpush.msra.mxu0 %v530
        %597 = vmatpush.msra.mxu0 %v529
        %598 = vmatpush.msra.mxu0 %v528
        %599 = vmatpush.msra.mxu0 %v527
        %600 = vmatpush.msra.mxu0 %v526
        %601 = vmatpush.msra.mxu0 %v525
        %602 = vmatpush.msra.mxu0 %v524
        %603 = vmatpush.msra.mxu0 %v523
        %604 = vmatpush.msra.mxu0 %v522
        %605 = vmatmul.f32.gmra.mxu0 %v487
        %v606 = vpop.f32.mrf.mxu0
        %v607 = vadd.f32 %v584, %v606
        %608 = vmatmul.f32.gmra.mxu0 %v488
        %v609 = vpop.f32.mrf.mxu0
        %v610 = vadd.f32 %v587, %v609
        %611 = vdwg.mxu0
        %v612 = vmax.f32 %v607, 0.0
        %v613 = vmax.f32 %v610, 0.0
        %s614 = scalar_lea.vmem [#allocation9], 128
        %v615 = vld [vmem:[%s614] sm:$0xff]
        %v616 = vld [vmem:[%s614 + $0x8] sm:$0xff]
        %v617 = vld [vmem:[%s614 + $0x10] sm:$0xff]
        %v618 = vld [vmem:[%s614 + $0x18] sm:$0xff]
        %v619 = vld [vmem:[%s614 + $0x20] sm:$0xff]
        %v620 = vld [vmem:[%s614 + $0x28] sm:$0xff]
        %v621 = vld [vmem:[%s614 + $0x30] sm:$0xff]
        %v622 = vld [vmem:[%s614 + $0x38] sm:$0xff]
        %v623 = vld [vmem:[%s614 + $0x40] sm:$0xff]
        %v624 = vld [vmem:[%s614 + $0x48] sm:$0xff]
        %v625 = vld [vmem:[%s614 + $0x50] sm:$0xff]
        %v626 = vld [vmem:[%s614 + $0x58] sm:$0xff]
        %v627 = vld [vmem:[%s614 + $0x60] sm:$0xff]
        %v628 = vld [vmem:[%s614 + $0x68] sm:$0xff]
        %v629 = vld [vmem:[%s614 + $0x70] sm:$0xff]
        %v630 = vld [vmem:[%s614 + $0x78] sm:$0xff]
        %s631 = scalar_lea.vmem %s4, 1
        %v632 = vld [vmem:[%s631] sm:$0x1]
        %v634 = vperm.slane %v632, 0
        %636 = vmatpush.msra.mxu0 %v630
        %637 = vmatpush.msra.mxu0 %v629
        %638 = vmatpush.msra.mxu0 %v628
        %639 = vmatpush.msra.mxu0 %v627
        %640 = vmatpush.msra.mxu0 %v626
        %641 = vmatpush.msra.mxu0 %v625
        %642 = vmatpush.msra.mxu0 %v624
        %643 = vmatpush.msra.mxu0 %v623
        %644 = vmatpush.msra.mxu0 %v622
        %645 = vmatpush.msra.mxu0 %v621
        %646 = vmatpush.msra.mxu0 %v620
        %647 = vmatpush.msra.mxu0 %v619
        %648 = vmatpush.msra.mxu0 %v618
        %649 = vmatpush.msra.mxu0 %v617
        %650 = vmatpush.msra.mxu0 %v616
        %651 = vmatpush.msra.mxu0 %v615
        %652 = vmatmul.f32.gmra.mxu0 %v612
        %v653 = vpop.f32.mrf.mxu0
        %v654 = vadd.f32 %v634, %v653
        %655 = vmatmul.f32.gmra.mxu0 %v613
        %v656 = vpop.f32.mrf.mxu0
        %v657 = vadd.f32 %v634, %v656
        %658 = vdwg.mxu0
        %v659 = vadd.f32 %v654, %v477
        %v660 = vadd.f32 %v657, %v478
        %661 = vst [vmem:[%s294] sm:$0xff] %v659
        %662 = vst [vmem:[%s294 + $0x8] sm:$0xff] %v660
        %s663 = sand.u32 %s142, 1
        %s664 = scalar_lea.sflag [#allocation5], %s663
        %s665 = sand.u32 %s142, 1
        %s666 = smul.addr %s665, 16
        %s667 = scalar_lea.vmem [#allocation11], %s666
        // Predicated region
        $region57: #{tpu_custom_call.1} parent=39 // pred_check
          %p668 = pneg %p152
        $region58: #{tpu_custom_call.1} parent=39 // pred_check_branch
          %670 = sbr.rel (%p668) target = $region60
        $region59: #{tpu_custom_call.1} parent=39 // pred_region
          %672 = vsyncadd %s664, 0
          %s673 = smul.addr %s24, 2
          %s674 = smul.addr %s673, 8
          %s675 = scalar_lea.hbm %s5, %s674
          %s676 = sshll.u32 %s667, 4
          %s677 = int_to_ptr.vmem [resolvable:$true] %s676
          %s678 = sshll.u32 %s675, 4
          %s679 = int_to_ptr.hbm [resolvable:$true] %s678
          %684 = dma.vmem_to_hbm [thread:$0]  %s677, 256, %s679, %s664, 128, 128, 8
        $region60: #{tpu_custom_call.1} parent=39 // pred_fallthru
          _
      $region40: #{tpu_custom_call.1} parent=5 // pred_fallthru
        _
      %p685 = scmp.le.s32.totalorder 2, %s19
      // Predicated region
      $region61: #{tpu_custom_call.1} parent=5 // pred_check
        %p686 = pneg %p685
      $region62: #{tpu_custom_call.1} parent=5 // pred_check_branch
        %688 = sbr.rel (%p686) target = $region64
      $region63: #{tpu_custom_call.1} parent=5 // pred_region
        %s689 = ssub.s32 %s19, 2
        // Predicated region
        $region65: #{tpu_custom_call.1} parent=63 // pred_check
          %p690 = pneg %p158
        $region66: #{tpu_custom_call.1} parent=63 // pred_check_branch
          %692 = sbr.rel (%p690) target = $region68
        $region67: #{tpu_custom_call.1} parent=63 // pred_region
          %s693 = sand.u32 %s143, 1
          %s694 = scalar_lea.sflag [#allocation5], %s693
          %s695 = sand.u32 %s143, 1
          %s696 = smul.addr %s695, 16
          %s697 = scalar_lea.vmem [#allocation11], %s696
          %699 = dma.done %s694, 256
        $region68: #{tpu_custom_call.1} parent=63 // pred_fallthru
          _
      $region64: #{tpu_custom_call.1} parent=5 // pred_fallthru
        _
    $region6: #{tpu_custom_call.1} parent=1 // loop_footer
      %s23 = sadd.s32 1, %s19
    $region7: #{tpu_custom_call.1} parent=1 // loop_footer_branch
      %18 = sbr.rel target = $region3
    $region8: #{tpu_custom_call.1} parent=1 // loop_exit
      _
    %700 = vsyncpa [#allocation4], 1
    %s701 = scalar_lea.sflag [#allocation4], 1
    %702 = vsyncpa %s701, 1
    %703 = vsyncpa [#allocation7], 1
    %704 = vsyncpa [#allocation10], 1
    %705 = vsyncpa [#allocation5], 1
    %s706 = scalar_lea.sflag [#allocation5], 1
    %707 = vsyncpa %s706, 1

</llo_original>
